<compile_context>
chip_gen: v7x
topology: tpu7x:2x2x1
jax: 0.10.0
libtpu: 0.0.40
codegen_flags: <defaults>
</compile_context>

<pallas_src>
import jax
import jax.numpy as jnp
from jax.experimental import pallas as pl
from jax.experimental.pallas import tpu as pltpu


def _round_up(x, m):
    return (x + m - 1) // m * m


def _fused_head_kernel(x_ref, w_ref, b_ref, out_ref):
    # x_ref:   (tm, D_pad)    f32 activation tile (cast to bf16 here, on-chip)
    # w_ref:   (D_pad, Cpad)  bf16 fused (cls ++ bbox) weight slab, (in x out),
    #                         grid-invariant -> fetched into VMEM once
    # b_ref:   (1, Cpad)      f32 fused bias, grid-invariant
    # out_ref: (tm, Cpad)     f32 fused output tile
    x_bf16 = x_ref[...].astype(jnp.bfloat16)
    acc = jnp.dot(x_bf16, w_ref[...], preferred_element_type=jnp.float32)
    out_ref[...] = (acc + b_ref[...]).astype(out_ref.dtype)


def prepare_predictor_params(w_cls, b_cls, w_bbox, b_bbox, *, lane=128):
    """One-time packing of the FastRCNN head parameters (keep out of hot path).

    Fuses cls_score / bbox_pred into a single lane-padded (D_pad, Cpad) bf16
    weight in (in x out) layout plus a (1, Cpad) f32 bias, so the per-call
    forward never re-transposes / re-casts / re-pads the weights.
    """
    C1, D = w_cls.shape
    C2 = w_bbox.shape[0]
    Cpad = _round_up(C1 + C2, lane)
    D_pad = _round_up(D, lane)

    w = jnp.concatenate([jnp.asarray(w_cls, jnp.float32),
                         jnp.asarray(w_bbox, jnp.float32)], axis=0)  # (C1+C2, D)
    w = jnp.pad(w, ((0, Cpad - (C1 + C2)), (0, D_pad - D)))          # zero pad
    w_t = w.T.astype(jnp.bfloat16)                                   # (D_pad, Cpad)

    b = jnp.concatenate([jnp.asarray(b_cls, jnp.float32),
                         jnp.asarray(b_bbox, jnp.float32)], axis=0)
    b = jnp.pad(b, (0, Cpad - (C1 + C2))).reshape(1, Cpad)           # (1, Cpad) f32

    return {"w": w_t, "b": b, "C1": int(C1), "C2": int(C2), "D": int(D)}


def _estimate_vmem_bytes(tm, D_pad, Cpad):
    # Conservative (double-buffered) per-kernel VMEM working-set estimate.
    return (2 * tm * D_pad * 4        # f32 activation tiles
            + 2 * D_pad * Cpad * 2    # bf16 fused weight slab (alloc is 2x)
            + 2 * Cpad * 4            # f32 bias
            + 2 * tm * Cpad * 4)      # f32 output tiles


def _pick_tm(N, D_pad, Cpad, *, vmem_budget_bytes=40 * 1024 * 1024):
    """Adaptive M tile: small N pads only to 8 rows, large N uses 128/256-row
    tiles (>=2 M tiles for dual-TC v7x), shrunk to fit the VMEM budget."""
    N = max(N, 1)
    if N <= 128:
        tm = _round_up(N, 8)
    elif N <= 512:
        tm = 128
    else:
        tm = 256
    while tm > 8 and _estimate_vmem_bytes(tm, D_pad, Cpad) > vmem_budget_bytes:
        tm = max(8, tm // 2)
    return tm


def box_predictor_forward(x, params, *, tm=None):
    """Pallas implementation of MinimalPredictorWrapper.forward.

    x:      (N, C, H, W) or (N, D) features
    params: output of prepare_predictor_params
    returns (scores (N, C1), proposal_deltas (N, C2)) in float32
    """
    w_t, bias = params["w"], params["b"]
    C1, C2, D = params["C1"], params["C2"], params["D"]

    if x.ndim > 2:
        x = x.reshape(x.shape[0], -1)        # torch.flatten(x, start_dim=1)
    x = x.astype(jnp.float32)                # no-op for f32 inputs
    N = x.shape[0]
    assert x.shape[1] == D, "feature dim mismatch with prepared weights"

    D_pad, Cpad = w_t.shape
    if tm is None:
        tm = _pick_tm(N, D_pad, Cpad)
    tm = _round_up(min(tm, _round_up(max(N, 1), 8)), 8)
    N_pad = _round_up(max(N, 1), tm)

    # Per-call activation prep: only zero-pad rows / K columns if needed
    # (no dtype cast pass — the kernel casts to bf16 on-chip).
    if N_pad != N or D_pad != D:
        x = jnp.pad(x, ((0, N_pad - N), (0, D_pad - D)))

    grid = (N_pad // tm,)
    flops = 2 * N_pad * D_pad * Cpad
    bytes_accessed = (N_pad * D_pad * 4            # f32 activations
                      + D_pad * Cpad * 2           # bf16 fused weights (once)
                      + Cpad * 4                   # f32 bias
                      + N_pad * Cpad * 4)          # f32 fused output

    vmem_limit = max(32 * 1024 * 1024,
                     min(_estimate_vmem_bytes(tm, D_pad, Cpad) + (8 << 20),
                         48 * 1024 * 1024))

    fused = pl.pallas_call(
        _fused_head_kernel,
        out_shape=jax.ShapeDtypeStruct((N_pad, Cpad), jnp.float32),
        grid_spec=pltpu.PrefetchScalarGridSpec(
            num_scalar_prefetch=0,
            grid=grid,
            in_specs=[
                pl.BlockSpec((tm, D_pad), lambda i: (i, 0)),      # activations
                pl.BlockSpec((D_pad, Cpad), lambda i: (0, 0)),    # fused weights (VMEM-resident)
                pl.BlockSpec((1, Cpad), lambda i: (0, 0)),        # fused bias
            ],
            out_specs=pl.BlockSpec((tm, Cpad), lambda i: (i, 0)),
        ),
        compiler_params=pltpu.CompilerParams(
            dimension_semantics=("parallel",),
            vmem_limit_bytes=vmem_limit,
        ),
        cost_estimate=pl.CostEstimate(
            flops=flops, bytes_accessed=bytes_accessed, transcendentals=0),
    )(x, w_t, bias)

    fused = fused[:N]
    scores = fused[:, :C1]
    proposal_deltas = fused[:, C1:C1 + C2]
    return scores, proposal_deltas


if __name__ == "__main__":
    key = jax.random.PRNGKey(0)
    k_x, k_wc, k_wb = jax.random.split(key, 3)

    # Small shapes consistent with FastRCNNOutputLayers:
    # 16 ROI-pooled proposals, 4 channels, 8x8 pooled spatial -> D = 256
    N, C, H, W = 16, 4, 8, 8
    D = C * H * W
    num_classes = 8
    C1 = num_classes + 1          # cls_score out_features
    C2 = num_classes * 4          # bbox_pred out_features (class-specific boxes)

    x = jax.random.normal(k_x, (N, C, H, W), dtype=jnp.float32)

    # Deterministic init matching init_cls(): normal(std=0.01)/(std=0.001), bias 0
    w_cls = 0.01 * jax.random.normal(k_wc, (C1, D), dtype=jnp.float32)
    b_cls = jnp.zeros((C1,), dtype=jnp.float32)
    w_bbox = 0.001 * jax.random.normal(k_wb, (C2, D), dtype=jnp.float32)
    b_bbox = jnp.zeros((C2,), dtype=jnp.float32)

    # Pack weights once (outside the per-call hot path).
    params = prepare_predictor_params(w_cls, b_cls, w_bbox, b_bbox)
    jax.block_until_ready(params["w"])

    scores, deltas = box_predictor_forward(x, params)
    jax.block_until_ready((scores, deltas))

    # Reference checks.
    x_flat = x.reshape(N, -1)
    # Tight check vs. a bf16-operand / f32-accumulation reference (matches kernel precision).
    ref_scores_bf16 = jnp.dot(x_flat.astype(jnp.bfloat16),
                              w_cls.T.astype(jnp.bfloat16),
                              preferred_element_type=jnp.float32) + b_cls
    ref_deltas_bf16 = jnp.dot(x_flat.astype(jnp.bfloat16),
                              w_bbox.T.astype(jnp.bfloat16),
                              preferred_element_type=jnp.float32) + b_bbox
    # Loose check vs. the full-f32 PyTorch-equivalent reference.
    ref_scores_f32 = x_flat @ w_cls.T + b_cls
    ref_deltas_f32 = x_flat @ w_bbox.T + b_bbox

    assert scores.shape == (N, C1) and deltas.shape == (N, C2)
    assert jnp.allclose(scores, ref_scores_bf16, atol=1e-3, rtol=1e-3)
    assert jnp.allclose(deltas, ref_deltas_bf16, atol=1e-3, rtol=1e-3)
    assert jnp.allclose(scores, ref_scores_f32, atol=5e-2, rtol=5e-2)
    assert jnp.allclose(deltas, ref_deltas_f32, atol=5e-2, rtol=5e-2)

    # TODO(synk): losses()/inference() delegate to detectron2's FastRCNNOutputLayers
    # (NMS, box decoding, cross-entropy) and are outside this forward-pass kernel.
    print("KERNEL_OK")
</pallas_src>

<mosaic_0001>
module attributes {stable_mosaic.version = 11 : i64} {
  func.func @_fused_head_kernel(%arg0: i32, %arg1: memref<16x256xf32, #tpu.memory_space<vmem>>, %arg2: memref<256x128xbf16, #tpu.memory_space<vmem>>, %arg3: memref<1x128xf32, #tpu.memory_space<vmem>>, %arg4: memref<16x128xf32, #tpu.memory_space<vmem>>) attributes {dimension_semantics = [#tpu.dimension_semantics<parallel>], iteration_bounds = array<i64: 1>, scalar_prefetch = 0 : i64, scratch_operands = 0 : i64, tpu.core_type = #tpu.core_type<tc>, window_params = [{transform_indices = @transform_0, window_bounds = array<i64: 16, 256>}, {pipeline_mode = #tpu.pipeline_mode<synchronous>, transform_indices = @transform_1, window_bounds = array<i64: 256, 128>}, {pipeline_mode = #tpu.pipeline_mode<synchronous>, transform_indices = @transform_2, window_bounds = array<i64: 1, 128>}, {transform_indices = @transform_3, window_bounds = array<i64: 16, 128>}]} {
    %c0 = arith.constant 0 : index
    %c0_0 = arith.constant 0 : index
    %0 = vector.load %arg1[%c0, %c0_0] : memref<16x256xf32, #tpu.memory_space<vmem>>, vector<16x256xf32>
    %1 = arith.truncf %0 : vector<16x256xf32> to vector<16x256xbf16>
    %c0_1 = arith.constant 0 : index
    %c0_2 = arith.constant 0 : index
    %2 = vector.load %arg2[%c0_1, %c0_2] : memref<256x128xbf16, #tpu.memory_space<vmem>>, vector<256x128xbf16>
    %cst = arith.constant dense<0.000000e+00> : vector<16x128xf32>
    %3 = tpu.matmul %1, %2, %cst {dimension_numbers = #tpu.dot_dimension_numbers<[1], [0], [0], [1], [0, 0, 1, 1], [], []>} : vector<16x256xbf16>, vector<256x128xbf16>, vector<16x128xf32> -> vector<16x128xf32>
    %c0_3 = arith.constant 0 : index
    %c0_4 = arith.constant 0 : index
    %4 = vector.load %arg3[%c0_3, %c0_4] : memref<1x128xf32, #tpu.memory_space<vmem>>, vector<1x128xf32>
    %5 = vector.broadcast %4 : vector<1x128xf32> to vector<16x128xf32>
    %6 = arith.addf %3, %5 : vector<16x128xf32>
    %c0_5 = arith.constant 0 : index
    %c0_6 = arith.constant 0 : index
    %7 = vector.load %arg4[%c0_5, %c0_6] : memref<16x128xf32, #tpu.memory_space<vmem>>, vector<16x128xf32>
    tpu.vector_store %arg4[%c0_5, %c0_6], %6 {strides = array<i32>} : memref<16x128xf32, #tpu.memory_space<vmem>>, vector<16x128xf32>,
    return
  }
  func.func @transform_0(%arg0: i32) -> (i32, i32) {
    %c0_i32 = arith.constant 0 : i32
    %c0_i32_0 = arith.constant 0 : i32
    return %arg0, %c0_i32 : i32, i32
  }
  func.func @transform_1(%arg0: i32) -> (i32, i32) {
    %c0_i32 = arith.constant 0 : i32
    %c0_i32_0 = arith.constant 0 : i32
    %c0_i32_1 = arith.constant 0 : i32
    return %c0_i32, %c0_i32_0 : i32, i32
  }
  func.func @transform_2(%arg0: i32) -> (i32, i32) {
    %c0_i32 = arith.constant 0 : i32
    %c0_i32_0 = arith.constant 0 : i32
    %c0_i32_1 = arith.constant 0 : i32
    return %c0_i32, %c0_i32_0 : i32, i32
  }
  func.func @transform_3(%arg0: i32) -> (i32, i32) {
    %c0_i32 = arith.constant 0 : i32
    %c0_i32_0 = arith.constant 0 : i32
    return %arg0, %c0_i32 : i32, i32
  }
}

</mosaic_0001>

<llo_original>
// kernel: tpu_custom_call.1
$region0: #{tpu_custom_call.1}
  #allocation0 [shape = 'u32[]', space=smem, size = 0x4, offset = 0x4, fixed_abs, tag = 'smem constant byte address 0x4 - core index']
  #allocation1 [shape = 'u32[144,128]{1,0:T(1,128)}', space=vmem, size = 0x12000, scoped, tag = 'internal scratch']
  %s0 = inlined_call_operand.hbm [shape: f32[16,256], index: 0, kind: input, shape index: {}]
  %s1 = inlined_call_operand.hbm [shape: bf16[256,128], index: 1, kind: input, shape index: {}]
  %s2 = inlined_call_operand.vmem [shape: f32[1,128], index: 2, kind: input, shape index: {}]
  %s3 = inlined_call_operand.hbm [shape: f32[16,128], index: 3, kind: output, shape index: {}]
  %s4 = sld [smem:[#allocation0]]
  $region30: #{tpu_custom_call.1} parent=0
    _
  %s6 = ssub.s32 1, %s4
  %s7 = scalar_select 0, %s6, %s4
  $region1: #{tpu_custom_call.1} parent=0
    #allocation2 [shape = 'u8[16384]{0}', space=vmem, size = 0x4000, scoped, tag = 'input window, operand 0, single buffered']
    #allocation3 [shape = 's32[1]{0}', space=sflag, size = 0x4, scoped, tag = 'scoped memory for tpu_custom_call.1']
    #allocation4 [shape = 's32[1]{0}', space=sflag, size = 0x4, scoped, tag = 'scoped memory for tpu_custom_call.1']
    #allocation5 [shape = 'u8[65536]{0}', space=vmem, size = 0x10000, scoped, tag = 'input window, operand 1, single buffered']
    #allocation6 [shape = 's32[1]{0}', space=sflag, size = 0x4, scoped, tag = 'scoped memory for tpu_custom_call.1']
    #allocation7 [shape = 'u8[8192]{0}', space=vmem, size = 0x2000, scoped, tag = 'output window, operand 0, single buffered']
    %8 = vsyncpa [#allocation3], 0
    %9 = vsyncpa [#allocation6], 0
    %10 = vsyncpa [#allocation4], 0
    // Predicated region
    $region2: #{tpu_custom_call.1} parent=1 // pred_check
      _
    $region3: #{tpu_custom_call.1} parent=1 // pred_check_branch
      %12 = sbr.rel (0) target = $region5
    $region4: #{tpu_custom_call.1} parent=1 // pred_region
      %s14 = ssub.s32 512, 512
      %15 = vsyncadd [#allocation3], %s14
      %s16 = sshll.u32 [#allocation2], 4
      %s17 = int_to_ptr.vmem [resolvable:$true] %s16
      %22 = dma.hbm_to_vmem [thread:$0]  %s0, 512, %s17, [#allocation3], 256, 256, 16
    $region5: #{tpu_custom_call.1} parent=1 // pred_fallthru
      _
    // Predicated region
    $region6: #{tpu_custom_call.1} parent=1 // pred_check
      _
    $region7: #{tpu_custom_call.1} parent=1 // pred_check_branch
      %24 = sbr.rel (0) target = $region9
    $region8: #{tpu_custom_call.1} parent=1 // pred_region
      %s26 = ssub.s32 2048, 2048
      %27 = vsyncadd [#allocation6], %s26
      %s28 = sshll.u32 [#allocation5], 4
      %s29 = int_to_ptr.vmem [resolvable:$true] %s28
      %34 = dma.hbm_to_vmem [thread:$0]  %s1, 2048, %s29, [#allocation6], 64, 64, 4
    $region9: #{tpu_custom_call.1} parent=1 // pred_fallthru
      _
    // Predicated region
    $region10: #{tpu_custom_call.1} parent=1 // pred_check
      _
    $region11: #{tpu_custom_call.1} parent=1 // pred_check_branch
      %36 = sbr.rel (0) target = $region13
    $region12: #{tpu_custom_call.1} parent=1 // pred_region
      _
    $region13: #{tpu_custom_call.1} parent=1 // pred_fallthru
      _
    // Predicated region
    $region14: #{tpu_custom_call.1} parent=1 // pred_check
      _
    $region15: #{tpu_custom_call.1} parent=1 // pred_check_branch
      %38 = sbr.rel (0) target = $region17
    $region16: #{tpu_custom_call.1} parent=1 // pred_region
      %39 = dma.done [#allocation3], 512
    $region17: #{tpu_custom_call.1} parent=1 // pred_fallthru
      _
    // Predicated region
    $region18: #{tpu_custom_call.1} parent=1 // pred_check
      _
    $region19: #{tpu_custom_call.1} parent=1 // pred_check_branch
      %41 = sbr.rel (0) target = $region21
    $region20: #{tpu_custom_call.1} parent=1 // pred_region
      %42 = dma.done [#allocation6], 2048
    $region21: #{tpu_custom_call.1} parent=1 // pred_fallthru
      _
    %v44 = vld [vmem:[#allocation2] sm:$0xff]
    %v45 = vld [vmem:[#allocation2 + $0x8] sm:$0xff]
    %v46 = vld [vmem:[#allocation2 + $0x10] sm:$0xff]
    %v47 = vld [vmem:[#allocation2 + $0x18] sm:$0xff]
    %v48 = vpack.c.bf16 %v46, %v44
    %v49 = vpack.c.bf16 %v47, %v45
    %v50 = vld [vmem:[#allocation5] sm:$0xf]
    %v51 = vld [vmem:[#allocation5 + $0x4] sm:$0xf]
    %v52 = vld [vmem:[#allocation5 + $0x8] sm:$0xf]
    %v53 = vld [vmem:[#allocation5 + $0xc] sm:$0xf]
    %v54 = vld [vmem:[#allocation5 + $0x10] sm:$0xf]
    %v55 = vld [vmem:[#allocation5 + $0x14] sm:$0xf]
    %v56 = vld [vmem:[#allocation5 + $0x18] sm:$0xf]
    %v57 = vld [vmem:[#allocation5 + $0x1c] sm:$0xf]
    %v58 = vld [vmem:[#allocation5 + $0x20] sm:$0xf]
    %v59 = vld [vmem:[#allocation5 + $0x24] sm:$0xf]
    %v60 = vld [vmem:[#allocation5 + $0x28] sm:$0xf]
    %v61 = vld [vmem:[#allocation5 + $0x2c] sm:$0xf]
    %v62 = vld [vmem:[#allocation5 + $0x30] sm:$0xf]
    %v63 = vld [vmem:[#allocation5 + $0x34] sm:$0xf]
    %v64 = vld [vmem:[#allocation5 + $0x38] sm:$0xf]
    %v65 = vld [vmem:[#allocation5 + $0x3c] sm:$0xf]
    %v66 = vld [vmem:[#allocation5 + $0x40] sm:$0xf]
    %v67 = vld [vmem:[#allocation5 + $0x44] sm:$0xf]
    %v68 = vld [vmem:[#allocation5 + $0x48] sm:$0xf]
    %v69 = vld [vmem:[#allocation5 + $0x4c] sm:$0xf]
    %v70 = vld [vmem:[#allocation5 + $0x50] sm:$0xf]
    %v71 = vld [vmem:[#allocation5 + $0x54] sm:$0xf]
    %v72 = vld [vmem:[#allocation5 + $0x58] sm:$0xf]
    %v73 = vld [vmem:[#allocation5 + $0x5c] sm:$0xf]
    %v74 = vld [vmem:[#allocation5 + $0x60] sm:$0xf]
    %v75 = vld [vmem:[#allocation5 + $0x64] sm:$0xf]
    %v76 = vld [vmem:[#allocation5 + $0x68] sm:$0xf]
    %v77 = vld [vmem:[#allocation5 + $0x6c] sm:$0xf]
    %v78 = vld [vmem:[#allocation5 + $0x70] sm:$0xf]
    %v79 = vld [vmem:[#allocation5 + $0x74] sm:$0xf]
    %v80 = vld [vmem:[#allocation5 + $0x78] sm:$0xf]
    %v81 = vld [vmem:[#allocation5 + $0x7c] sm:$0xf]
    %v82 = vld [vmem:[%s2] sm:$0x1]
    %v84 = vlaneseq
    %v85 = vshrl.u32 %v84, 7
    %v86 = vsub.s32 0, %v85
    %v87 = vrot.slane %v82, %v86
    %v121 = vunpack.c.l.b16 %v50
    %v122 = vunpack.c.l.b16 %v51
    %v123 = vunpack.c.l.b16 %v52
    %v124 = vunpack.c.l.b16 %v53
    %v125 = vunpack.c.l.b16 %v54
    %v126 = vunpack.c.l.b16 %v55
    %v127 = vunpack.c.l.b16 %v56
    %v128 = vunpack.c.l.b16 %v57
    %v129 = vunpack.c.l.b16 %v58
    %v130 = vunpack.c.l.b16 %v59
    %v131 = vunpack.c.l.b16 %v60
    %v132 = vunpack.c.l.b16 %v61
    %v133 = vunpack.c.l.b16 %v62
    %v134 = vunpack.c.l.b16 %v63
    %v135 = vunpack.c.l.b16 %v64
    %v136 = vunpack.c.l.b16 %v65
    %v137 = vunpack.c.l.b16 %v66
    %v138 = vunpack.c.l.b16 %v67
    %v139 = vunpack.c.l.b16 %v68
    %v140 = vunpack.c.l.b16 %v69
    %v141 = vunpack.c.l.b16 %v70
    %v142 = vunpack.c.l.b16 %v71
    %v143 = vunpack.c.l.b16 %v72
    %v144 = vunpack.c.l.b16 %v73
    %v145 = vunpack.c.l.b16 %v74
    %v146 = vunpack.c.l.b16 %v75
    %v147 = vunpack.c.l.b16 %v76
    %v148 = vunpack.c.l.b16 %v77
    %v149 = vunpack.c.l.b16 %v78
    %v150 = vunpack.c.l.b16 %v79
    %v151 = vunpack.c.l.b16 %v80
    %v152 = vunpack.c.l.b16 %v81
    %v153 = vpack.c.b16 %v122, %v121
    %v154 = vpack.c.b16 %v124, %v123
    %v155 = vpack.c.b16 %v126, %v125
    %v156 = vpack.c.b16 %v128, %v127
    %v157 = vpack.c.b16 %v130, %v129
    %v158 = vpack.c.b16 %v132, %v131
    %v159 = vpack.c.b16 %v134, %v133
    %v160 = vpack.c.b16 %v136, %v135
    %v161 = vpack.c.b16 %v138, %v137
    %v162 = vpack.c.b16 %v140, %v139
    %v163 = vpack.c.b16 %v142, %v141
    %v164 = vpack.c.b16 %v144, %v143
    %v165 = vpack.c.b16 %v146, %v145
    %v166 = vpack.c.b16 %v148, %v147
    %v167 = vpack.c.b16 %v150, %v149
    %v168 = vpack.c.b16 %v152, %v151
    %185 = vmatprep.subr.bf16.mxu0 0
    %186 = vmatpush1.bf16.msra.mxu0 %v153
    %187 = vmatprep.subr.bf16.mxu0 0
    %188 = vmatpush1.bf16.msra.mxu0 %v154
    %189 = vmatprep.subr.bf16.mxu0 0
    %190 = vmatpush1.bf16.msra.mxu0 %v155
    %191 = vmatprep.subr.bf16.mxu0 0
    %192 = vmatpush1.bf16.msra.mxu0 %v156
    %193 = vmatprep.subr.bf16.mxu0 0
    %194 = vmatpush1.bf16.msra.mxu0 %v157
    %195 = vmatprep.subr.bf16.mxu0 0
    %196 = vmatpush1.bf16.msra.mxu0 %v158
    %197 = vmatprep.subr.bf16.mxu0 0
    %198 = vmatpush1.bf16.msra.mxu0 %v159
    %199 = vmatprep.subr.bf16.mxu0 0
    %200 = vmatpush1.bf16.msra.mxu0 %v160
    %201 = vmatprep.subr.bf16.mxu0 0
    %202 = vmatpush1.bf16.msra.mxu0 %v161
    %203 = vmatprep.subr.bf16.mxu0 0
    %204 = vmatpush1.bf16.msra.mxu0 %v162
    %205 = vmatprep.subr.bf16.mxu0 0
    %206 = vmatpush1.bf16.msra.mxu0 %v163
    %207 = vmatprep.subr.bf16.mxu0 0
    %208 = vmatpush1.bf16.msra.mxu0 %v164
    %209 = vmatprep.subr.bf16.mxu0 0
    %210 = vmatpush1.bf16.msra.mxu0 %v165
    %211 = vmatprep.subr.bf16.mxu0 0
    %212 = vmatpush1.bf16.msra.mxu0 %v166
    %213 = vmatprep.subr.bf16.mxu0 0
    %214 = vmatpush1.bf16.msra.mxu0 %v167
    %215 = vmatprep.subr.bf16.mxu0 0
    %216 = vmatpush1.bf16.msra.mxu0 %v168
    %217 = vmatprep.mubr.bf16.mxu0 %v49
    %218 = vmatmul.mubr.bf16.gmra.mrb[0].mxu0 %v48
    %v219 = vpop.f32.mrb[0].mxu0
    %v220 = vadd.f32 %v87, %v219
    %v221 = vpop.f32.mrb[0].mxu0
    %v222 = vpop.f32.mrb[0].mxu0
    %v223 = vadd.f32 %v87, %v222
    %v224 = vpop.f32.mrb[0].mxu0
    %225 = vdwg.mxu0
    %226 = vst [vmem:[#allocation7] sm:$0xff] %v220
    %227 = vst [vmem:[#allocation7 + $0x8] sm:$0xff] %v223
    // Predicated region
    $region22: #{tpu_custom_call.1} parent=1 // pred_check
      _
    $region23: #{tpu_custom_call.1} parent=1 // pred_check_branch
      %229 = sbr.rel (0) target = $region25
    $region24: #{tpu_custom_call.1} parent=1 // pred_region
      %s231 = ssub.s32 256, 256
      %232 = vsyncadd [#allocation4], %s231
      %s233 = sshll.u32 [#allocation7], 4
      %s234 = int_to_ptr.vmem [resolvable:$true] %s233
      %239 = dma.vmem_to_hbm [thread:$0]  %s234, 256, %s3, [#allocation4], 128, 128, 8
    $region25: #{tpu_custom_call.1} parent=1 // pred_fallthru
      _
    // Predicated region
    $region26: #{tpu_custom_call.1} parent=1 // pred_check
      _
    $region27: #{tpu_custom_call.1} parent=1 // pred_check_branch
      %241 = sbr.rel (0) target = $region29
    $region28: #{tpu_custom_call.1} parent=1 // pred_region
      %242 = dma.done [#allocation4], 256
    $region29: #{tpu_custom_call.1} parent=1 // pred_fallthru
      _
    %243 = vsyncpa [#allocation3], 1
    %244 = vsyncpa [#allocation6], 1
    %245 = vsyncpa [#allocation4], 1

</llo_original>
